<compile_context>
chip_gen: v7x
topology: tpu7x:2x2x1
jax: 0.10.0
libtpu: 0.0.40
codegen_flags: <defaults>
</compile_context>

<pallas_src>
import jax
import jax.numpy as jnp
from jax.experimental import pallas as pl
from jax.experimental.pallas import tpu as pltpu

LANE = 128


def _round_up(x, m):
    return ((x + m - 1) // m) * m


def encoder_kernel(x_ref, wbig_ref, bconv_ref, wpf_ref, bfc_ref, out_ref):
    # x_ref    : (B*H, Kp)      bf16  B samples' rows stacked; 3 conv taps live in K
    # wbig_ref : (Kp, W*Cmid)   bf16  block-Toeplitz conv weight (taps folded in K)
    # bconv_ref: (1,  W*Cmid)   f32   conv bias tiled per output column w
    # wpf_ref  : (W*Cmid, Fp)   bf16  fused avg-pool + fc weight (1/(H*W) folded in)
    # bfc_ref  : (1,  Fp)       f32   fc bias, lane padded
    # out_ref  : (B,  Fp)       f32   one row per sample, lane-dense
    BH = x_ref.shape[0]
    Fp = wpf_ref.shape[1]
    B = out_ref.shape[0]
    H = BH // B

    # Conv2d(3x3, pad=1): single MXU matmul, f32 accumulation (no zero-init/add).
    acc = jnp.dot(x_ref[...], wbig_ref[...], preferred_element_type=jnp.float32)

    # Bias + ReLU on the VPU.
    h = jnp.maximum(acc + bconv_ref[...], 0.0)                      # (B*H, W*Cmid) f32

    # Fused pool->fc: one bf16 MXU matmul, then sublane reduce over the H rows
    # of each sample (XLU) instead of two M=1 matmuls.
    y = jnp.dot(h.astype(jnp.bfloat16), wpf_ref[...],
                preferred_element_type=jnp.float32)                 # (B*H, Fp)
    pooled = jnp.sum(y.reshape(B, H, Fp), axis=1)                   # (B, Fp)

    out_ref[...] = pooled + bfc_ref[...]


def encoder_forward(x_nchw, params):
    """Forward pass of Encoder(pretrained_feature_extractor)(x)."""
    wconv, bconv, wfc, bfc = params  # torch layouts: (O,I,KH,KW), (O,), (F,Cmid), (F,)
    N, Cin, H, W = x_nchw.shape
    Cmid = wconv.shape[0]
    KH, KW = wconv.shape[2], wconv.shape[3]
    F = wfc.shape[0]
    PH, PW = (KH - 1) // 2, (KW - 1) // 2
    Hp, Wp = H + 2 * PH, W + 2 * PW
    WpC = Wp * Cin
    WCmid = W * Cmid
    Fp = _round_up(F, LANE)
    K = KH * WpC
    Kp = _round_up(K, LANE)

    # Samples per grid step: big B for MXU M-occupancy, but keep >= 2 grid steps
    # for small N so v7x can shard steps across both TensorCores.
    B = 8 if N >= 16 else max(1, N // 2)
    G = -(-N // B)
    Npad = G * B
    BH = B * H

    # --- NCHW -> padded NHWC, flatten (w, cin) into lanes, fold KH taps into K ---
    x = jnp.transpose(x_nchw, (0, 2, 3, 1)).astype(jnp.float32)            # (N,H,W,Cin)
    xp = jnp.pad(x, ((0, Npad - N), (PH, PH), (PW, PW), (0, 0)))           # (Npad,Hp,Wp,Cin)
    xp2 = xp.reshape(Npad, Hp, WpC)                                        # (Npad,Hp,Wp*Cin)
    x_taps = jnp.concatenate([xp2[:, kh:kh + H, :] for kh in range(KH)],
                             axis=-1)                                      # (Npad,H,KH*WpC)
    x_taps = jnp.pad(x_taps, ((0, 0), (0, 0), (0, Kp - K)))
    x_flat = x_taps.reshape(Npad * H, Kp).astype(jnp.bfloat16)             # (Npad*H, Kp)

    # --- block-Toeplitz conv weight, taps folded into the contraction dim:
    #     wbig[kh*WpC + wp*Cin + ci, w*Cmid + co] = wconv[co,ci,kh,wp-w] (0 else) ---
    w_t = jnp.transpose(wconv, (2, 3, 1, 0)).astype(jnp.float32)           # (KH,KW,Cin,Cmid)
    kw_rel = jnp.arange(Wp)[:, None] - jnp.arange(W)[None, :]              # (Wp, W) = wp - w
    valid = ((kw_rel >= 0) & (kw_rel < KW)).astype(jnp.float32)
    gth = w_t[:, jnp.clip(kw_rel, 0, KW - 1), :, :]                        # (KH,Wp,W,Cin,Cmid)
    gth = gth * valid[None, :, :, None, None]
    wbig = jnp.transpose(gth, (0, 1, 3, 2, 4)).reshape(K, WCmid)           # (KH*WpC, W*Cmid)
    wbig = jnp.pad(wbig, ((0, Kp - K), (0, 0))).astype(jnp.bfloat16)

    # Conv bias tiled per output column; fc weight fused with the 1/(H*W) pool scale.
    bconv_row = jnp.tile(bconv.astype(jnp.float32), (W,)).reshape(1, WCmid)
    wpf = jnp.tile(wfc.T.astype(jnp.float32) / float(H * W), (W, 1))       # (W*Cmid, F)
    wpf = jnp.pad(wpf, ((0, 0), (0, Fp - F))).astype(jnp.bfloat16)
    bfc_pad = jnp.pad(bfc.astype(jnp.float32), (0, Fp - F)).reshape(1, Fp)

    flops = G * (2 * BH * Kp * WCmid + 2 * BH * WCmid * Fp)
    bytes_accessed = (2 * x_flat.size + 2 * wbig.size + 4 * bconv_row.size
                      + 2 * wpf.size + 4 * bfc_pad.size + 4 * Npad * Fp)

    out3 = pl.pallas_call(
        encoder_kernel,
        out_shape=jax.ShapeDtypeStruct((G, B, Fp), jnp.float32),
        grid=(G,),
        in_specs=[
            pl.BlockSpec((BH, Kp), lambda g: (g, 0)),          # B samples' rows per step
            pl.BlockSpec((Kp, WCmid), lambda g: (0, 0)),       # conv weight (resident)
            pl.BlockSpec((1, WCmid), lambda g: (0, 0)),        # conv bias row
            pl.BlockSpec((WCmid, Fp), lambda g: (0, 0)),       # fused pool+fc weight
            pl.BlockSpec((1, Fp), lambda g: (0, 0)),           # fc bias
        ],
        out_specs=pl.BlockSpec((None, B, Fp), lambda g: (g, 0, 0)),
        compiler_params=pltpu.CompilerParams(
            dimension_semantics=("parallel",)),
        cost_estimate=pl.CostEstimate(
            flops=int(flops), transcendentals=0, bytes_accessed=int(bytes_accessed)),
    )(x_flat, wbig, bconv_row, wpf, bfc_pad)

    # TODO(synk): the requires_grad freezing in Encoder.forward is a training-time
    # parameter-flag mutation with no forward-pass equivalent; intentionally omitted.
    return out3.reshape(Npad, Fp)[:N, :F]


if __name__ == "__main__":
    N, Cin, H, W = 2, 4, 16, 16
    Cmid, F = 32, 16

    key = jax.random.PRNGKey(0)
    k1, k2, k3, k4, k5 = jax.random.split(key, 5)
    x = jax.random.normal(k1, (N, Cin, H, W), jnp.float32)
    wconv = jax.random.normal(k2, (Cmid, Cin, 3, 3), jnp.float32) * 0.1
    bconv = jax.random.normal(k3, (Cmid,), jnp.float32) * 0.1
    wfc = jax.random.normal(k4, (F, Cmid), jnp.float32) * 0.1
    bfc = jax.random.normal(k5, (F,), jnp.float32) * 0.1

    out = jax.block_until_ready(encoder_forward(x, (wconv, bconv, wfc, bfc)))

    # Pure-JAX reference mirroring the PyTorch forward.
    def reference(x):
        y = jax.lax.conv_general_dilated(
            x, wconv, window_strides=(1, 1), padding=((1, 1), (1, 1)),
            dimension_numbers=("NCHW", "OIHW", "NCHW"))
        y = y + bconv[None, :, None, None]
        y = jnp.maximum(y, 0.0)
        y = jnp.mean(y, axis=(2, 3))
        return y @ wfc.T + bfc[None, :]

    ref = reference(x)
    assert out.shape == (N, F) and out.dtype == jnp.float32
    # bf16 matmul operands (f32 accumulation) -> loosened tolerance.
    assert jnp.allclose(out, ref, rtol=2e-2, atol=2e-2), (out, ref)
    print("KERNEL_OK")
</pallas_src>

<mosaic_0001>
module attributes {stable_mosaic.version = 11 : i64} {
  func.func @encoder_kernel(%arg0: i32, %arg1: memref<16x256xbf16, #tpu.memory_space<vmem>>, %arg2: memref<256x512xbf16, #tpu.memory_space<vmem>>, %arg3: memref<1x512xf32, #tpu.memory_space<vmem>>, %arg4: memref<512x128xbf16, #tpu.memory_space<vmem>>, %arg5: memref<1x128xf32, #tpu.memory_space<vmem>>, %arg6: memref<1x1x128xf32, #tpu.memory_space<vmem>>) attributes {dimension_semantics = [#tpu.dimension_semantics<parallel>], iteration_bounds = array<i64: 2>, scalar_prefetch = 0 : i64, scratch_operands = 0 : i64, tpu.core_type = #tpu.core_type<tc>, window_params = [{transform_indices = @transform_0, window_bounds = array<i64: 16, 256>}, {pipeline_mode = #tpu.pipeline_mode<synchronous>, transform_indices = @transform_1, window_bounds = array<i64: 256, 512>}, {pipeline_mode = #tpu.pipeline_mode<synchronous>, transform_indices = @transform_2, window_bounds = array<i64: 1, 512>}, {pipeline_mode = #tpu.pipeline_mode<synchronous>, transform_indices = @transform_3, window_bounds = array<i64: 512, 128>}, {pipeline_mode = #tpu.pipeline_mode<synchronous>, transform_indices = @transform_4, window_bounds = array<i64: 1, 128>}, {transform_indices = @transform_5, window_bounds = array<i64: 1, 1, 128>}]} {
    %c0 = arith.constant 0 : index
    %c0_0 = arith.constant 0 : index
    %0 = vector.load %arg1[%c0, %c0_0] : memref<16x256xbf16, #tpu.memory_space<vmem>>, vector<16x256xbf16>
    %c0_1 = arith.constant 0 : index
    %c0_2 = arith.constant 0 : index
    %1 = vector.load %arg2[%c0_1, %c0_2] : memref<256x512xbf16, #tpu.memory_space<vmem>>, vector<256x512xbf16>
    %cst = arith.constant dense<0.000000e+00> : vector<16x512xf32>
    %2 = tpu.matmul %0, %1, %cst {dimension_numbers = #tpu.dot_dimension_numbers<[1], [0], [0], [1], [0, 0, 1, 1], [], []>} : vector<16x256xbf16>, vector<256x512xbf16>, vector<16x512xf32> -> vector<16x512xf32>
    %c0_3 = arith.constant 0 : index
    %c0_4 = arith.constant 0 : index
    %3 = vector.load %arg3[%c0_3, %c0_4] : memref<1x512xf32, #tpu.memory_space<vmem>>, vector<1x512xf32>
    %4 = vector.broadcast %3 : vector<1x512xf32> to vector<16x512xf32>
    %5 = arith.addf %2, %4 : vector<16x512xf32>
    %cst_5 = arith.constant 0.000000e+00 : f32
    %6 = vector.broadcast %cst_5 : f32 to vector<16x512xf32>
    %7 = arith.maximumf %5, %6 : vector<16x512xf32>
    %8 = arith.truncf %7 : vector<16x512xf32> to vector<16x512xbf16>
    %c0_6 = arith.constant 0 : index
    %c0_7 = arith.constant 0 : index
    %9 = vector.load %arg4[%c0_6, %c0_7] : memref<512x128xbf16, #tpu.memory_space<vmem>>, vector<512x128xbf16>
    %cst_8 = arith.constant dense<0.000000e+00> : vector<16x128xf32>
    %10 = tpu.matmul %8, %9, %cst_8 {dimension_numbers = #tpu.dot_dimension_numbers<[1], [0], [0], [1], [0, 0, 1, 1], [], []>} : vector<16x512xbf16>, vector<512x128xbf16>, vector<16x128xf32> -> vector<16x128xf32>
    %11 = vector.shape_cast %10 : vector<16x128xf32> to vector<1x16x128xf32>
    %cst_9 = arith.constant dense<0.000000e+00> : vector<1x128xf32>
    %12 = vector.multi_reduction <add>, %11, %cst_9 [1] : vector<1x16x128xf32> to vector<1x128xf32>
    %c0_10 = arith.constant 0 : index
    %c0_11 = arith.constant 0 : index
    %13 = vector.load %arg5[%c0_10, %c0_11] : memref<1x128xf32, #tpu.memory_space<vmem>>, vector<1x128xf32>
    %14 = arith.addf %12, %13 : vector<1x128xf32>
    %c0_12 = arith.constant 0 : index
    %c0_13 = arith.constant 0 : index
    %c0_14 = arith.constant 0 : index
    %15 = vector.load %arg6[%c0_12, %c0_13, %c0_14] : memref<1x1x128xf32, #tpu.memory_space<vmem>>, vector<1x1x128xf32>
    %16 = vector.shape_cast %15 : vector<1x1x128xf32> to vector<1x128xf32>
    %17 = vector.shape_cast %14 : vector<1x128xf32> to vector<1x1x128xf32>
    tpu.vector_store %arg6[%c0_12, %c0_13, %c0_14], %17 {strides = array<i32>} : memref<1x1x128xf32, #tpu.memory_space<vmem>>, vector<1x1x128xf32>,
    return
  }
  func.func @transform_0(%arg0: i32) -> (i32, i32) {
    %c0_i32 = arith.constant 0 : i32
    %c0_i32_0 = arith.constant 0 : i32
    return %arg0, %c0_i32 : i32, i32
  }
  func.func @transform_1(%arg0: i32) -> (i32, i32) {
    %c0_i32 = arith.constant 0 : i32
    %c0_i32_0 = arith.constant 0 : i32
    %c0_i32_1 = arith.constant 0 : i32
    return %c0_i32, %c0_i32_0 : i32, i32
  }
  func.func @transform_2(%arg0: i32) -> (i32, i32) {
    %c0_i32 = arith.constant 0 : i32
    %c0_i32_0 = arith.constant 0 : i32
    %c0_i32_1 = arith.constant 0 : i32
    return %c0_i32, %c0_i32_0 : i32, i32
  }
  func.func @transform_3(%arg0: i32) -> (i32, i32) {
    %c0_i32 = arith.constant 0 : i32
    %c0_i32_0 = arith.constant 0 : i32
    %c0_i32_1 = arith.constant 0 : i32
    return %c0_i32, %c0_i32_0 : i32, i32
  }
  func.func @transform_4(%arg0: i32) -> (i32, i32) {
    %c0_i32 = arith.constant 0 : i32
    %c0_i32_0 = arith.constant 0 : i32
    %c0_i32_1 = arith.constant 0 : i32
    return %c0_i32, %c0_i32_0 : i32, i32
  }
  func.func @transform_5(%arg0: i32) -> (i32, i32, i32) {
    %c0_i32 = arith.constant 0 : i32
    %c0_i32_0 = arith.constant 0 : i32
    %c0_i32_1 = arith.constant 0 : i32
    return %arg0, %c0_i32, %c0_i32_0 : i32, i32, i32
  }
}

</mosaic_0001>

<llo_original>
// kernel: tpu_custom_call.1
$region0: #{tpu_custom_call.1}
  #allocation0 [shape = 'u32[]', space=smem, size = 0x4, offset = 0x4, fixed_abs, tag = 'smem constant byte address 0x4 - core index']
  #allocation1 [shape = 'u32[144,128]{1,0:T(1,128)}', space=vmem, size = 0x12000, scoped, tag = 'internal scratch']
  %s0 = inlined_call_operand.hbm [shape: bf16[32,256], index: 0, kind: input, shape index: {}]
  %s1 = inlined_call_operand.hbm [shape: bf16[256,512], index: 1, kind: input, shape index: {}]
  %s2 = inlined_call_operand.vmem [shape: f32[1,512], index: 2, kind: input, shape index: {}]
  %s3 = inlined_call_operand.hbm [shape: bf16[512,128], index: 3, kind: input, shape index: {}]
  %s4 = inlined_call_operand.vmem [shape: f32[1,128], index: 4, kind: input, shape index: {}]
  %s5 = inlined_call_operand.hbm [shape: f32[2,1,128], index: 5, kind: output, shape index: {}]
  %s6 = sld [smem:[#allocation0]]
  $region65: #{tpu_custom_call.1} parent=0
    _
  %s8 = ssub.s32 1, %s6
  %s9 = scalar_select 0, %s8, %s6
  $region1: #{tpu_custom_call.1} parent=0
    #allocation2 [shape = 'u8[16384]{0}', space=vmem, size = 0x4000, scoped, tag = 'input window, operand 0']
    #allocation3 [shape = 's32[2]{0}', space=sflag, size = 0x8, scoped, tag = 'scoped memory for tpu_custom_call.1']
    #allocation4 [shape = 's32[2]{0}', space=sflag, size = 0x8, scoped, tag = 'scoped memory for tpu_custom_call.1']
    #allocation5 [shape = 'u8[262144]{0}', space=vmem, size = 0x40000, scoped, tag = 'input window, operand 1, single buffered']
    #allocation6 [shape = 's32[1]{0}', space=sflag, size = 0x4, scoped, tag = 'scoped memory for tpu_custom_call.1']
    #allocation7 [shape = 'u8[131072]{0}', space=vmem, size = 0x20000, scoped, tag = 'input window, operand 3, single buffered']
    #allocation8 [shape = 'u8[1024]{0}', space=vmem, size = 0x400, scoped, tag = 'output window, operand 0']
    %10 = vsyncpa [#allocation3], 0
    %s11 = scalar_lea.sflag [#allocation3], 1
    %12 = vsyncpa %s11, 0
    %13 = vsyncpa [#allocation6], 0
    %14 = vsyncpa [#allocation4], 0
    %s15 = scalar_lea.sflag [#allocation4], 1
    %16 = vsyncpa %s15, 0
    loop: start=0, step=1, limit=4
    $region2: #{tpu_custom_call.1} parent=1 // loop_pre_header
      _
    $region3: #{tpu_custom_call.1} parent=1 // loop_header
      %s18 = sphi 0, %s22
      %p19 = scmp.ge.s32.totalorder %s18, 4
      %s28 = sphi 0, %s30
      %s31 = sphi 0, %s28
      %s32 = sphi 0, %s31
      %s48 = sphi 0, %s32
      %s52 = sphi 0, %s52
      %s54 = sphi 0, %s52
      %s55 = sphi 0, %s54
      %s69 = sphi 0, %s55
      %s73 = sphi 0, %s73
      %s75 = sphi 0, %s73
      %s76 = sphi 0, %s75
      %s90 = sphi 0, %s76
      %s94 = sphi 0, %s94
      %s96 = sphi 0, %s94
      %s97 = sphi 0, %s96
      %s111 = sphi 0, %s97
      %s115 = sphi 0, %s115
      %s117 = sphi 0, %s115
      %s118 = sphi 0, %s117
      %s132 = sphi 0, %s118
      %s138 = sphi 0, %s140
      %s141 = sphi 0, %s138
      %s142 = sphi 0, %s141
      %s158 = sphi 0, %s142
    $region4: #{tpu_custom_call.1} parent=1 // loop_header_branch
      %21 = sbr.rel (%p19) target = $region8
    $region5: #{tpu_custom_call.1} parent=1 // loop_body
      %s23 = ssub.s32 %s18, 1
      %s24 = ssub.s32 %s18, 2
      %s25 = sadd.s32 %s18, 1
      %s26 = ssub.s32 %s18, %s25
      %p27 = scmp.eq.s32.totalorder %s26, 0
      %s29 = sadd.s32 %s28, 1
      %s30 = scalar_select %p27, %s28, %s29
      %p33 = pneg %p27
      %p34 = scmp.eq.s32.totalorder %s18, 1
      %p35 = por %p33, %p34
      %p36 = scmp.ne.s32.totalorder %s28, %s31
      %p37 = scmp.eq.s32.totalorder %s18, 0
      %p38 = por %p36, %p37
      %p39 = scmp.ne.s32.totalorder %s28, %s31
      %p40 = scmp.eq.s32.totalorder %s23, 1
      %p41 = por %p39, %p40
      %p42 = scmp.ne.s32.totalorder %s31, %s32
      %p43 = scmp.eq.s32.totalorder %s23, 0
      %p44 = por %p42, %p43
      %p45 = scmp.ne.s32.totalorder %s31, %s32
      %p46 = scmp.eq.s32.totalorder %s24, 1
      %p47 = por %p45, %p46
      %p49 = scmp.ne.s32.totalorder %s32, %s48
      %p50 = scmp.eq.s32.totalorder %s24, 0
      %p51 = por %p49, %p50
      %s53 = sadd.s32 %s52, 1
      %p56 = scmp.eq.s32.totalorder %s18, 1
      %p57 = scmp.ne.s32.totalorder %s52, %s54
      %p58 = scmp.eq.s32.totalorder %s18, 0
      %p59 = por %p57, %p58
      %p60 = scmp.ne.s32.totalorder %s52, %s54
      %p61 = scmp.eq.s32.totalorder %s23, 1
      %p62 = por %p60, %p61
      %p63 = scmp.ne.s32.totalorder %s54, %s55
      %p64 = scmp.eq.s32.totalorder %s23, 0
      %p65 = por %p63, %p64
      %p66 = scmp.ne.s32.totalorder %s54, %s55
      %p67 = scmp.eq.s32.totalorder %s24, 1
      %p68 = por %p66, %p67
      %p70 = scmp.ne.s32.totalorder %s55, %s69
      %p71 = scmp.eq.s32.totalorder %s24, 0
      %p72 = por %p70, %p71
      %s74 = sadd.s32 %s73, 1
      %p77 = scmp.eq.s32.totalorder %s18, 1
      %p78 = scmp.ne.s32.totalorder %s73, %s75
      %p79 = scmp.eq.s32.totalorder %s18, 0
      %p80 = por %p78, %p79
      %p81 = scmp.ne.s32.totalorder %s73, %s75
      %p82 = scmp.eq.s32.totalorder %s23, 1
      %p83 = por %p81, %p82
      %p84 = scmp.ne.s32.totalorder %s75, %s76
      %p85 = scmp.eq.s32.totalorder %s23, 0
      %p86 = por %p84, %p85
      %p87 = scmp.ne.s32.totalorder %s75, %s76
      %p88 = scmp.eq.s32.totalorder %s24, 1
      %p89 = por %p87, %p88
      %p91 = scmp.ne.s32.totalorder %s76, %s90
      %p92 = scmp.eq.s32.totalorder %s24, 0
      %p93 = por %p91, %p92
      %s95 = sadd.s32 %s94, 1
      %p98 = scmp.eq.s32.totalorder %s18, 1
      %p99 = scmp.ne.s32.totalorder %s94, %s96
      %p100 = scmp.eq.s32.totalorder %s18, 0
      %p101 = por %p99, %p100
      %p102 = scmp.ne.s32.totalorder %s94, %s96
      %p103 = scmp.eq.s32.totalorder %s23, 1
      %p104 = por %p102, %p103
      %p105 = scmp.ne.s32.totalorder %s96, %s97
      %p106 = scmp.eq.s32.totalorder %s23, 0
      %p107 = por %p105, %p106
      %p108 = scmp.ne.s32.totalorder %s96, %s97
      %p109 = scmp.eq.s32.totalorder %s24, 1
      %p110 = por %p108, %p109
      %p112 = scmp.ne.s32.totalorder %s97, %s111
      %p113 = scmp.eq.s32.totalorder %s24, 0
      %p114 = por %p112, %p113
      %s116 = sadd.s32 %s115, 1
      %p119 = scmp.eq.s32.totalorder %s18, 1
      %p120 = scmp.ne.s32.totalorder %s115, %s117
      %p121 = scmp.eq.s32.totalorder %s18, 0
      %p122 = por %p120, %p121
      %p123 = scmp.ne.s32.totalorder %s115, %s117
      %p124 = scmp.eq.s32.totalorder %s23, 1
      %p125 = por %p123, %p124
      %p126 = scmp.ne.s32.totalorder %s117, %s118
      %p127 = scmp.eq.s32.totalorder %s23, 0
      %p128 = por %p126, %p127
      %p129 = scmp.ne.s32.totalorder %s117, %s118
      %p130 = scmp.eq.s32.totalorder %s24, 1
      %p131 = por %p129, %p130
      %p133 = scmp.ne.s32.totalorder %s118, %s132
      %p134 = scmp.eq.s32.totalorder %s24, 0
      %p135 = por %p133, %p134
      %s136 = ssub.s32 %s18, %s25
      %p137 = scmp.eq.s32.totalorder %s136, 0
      %s139 = sadd.s32 %s138, 1
      %s140 = scalar_select %p137, %s138, %s139
      %p143 = pneg %p137
      %p144 = scmp.eq.s32.totalorder %s18, 1
      %p145 = por %p143, %p144
      %p146 = scmp.ne.s32.totalorder %s138, %s141
      %p147 = scmp.eq.s32.totalorder %s18, 0
      %p148 = por %p146, %p147
      %p149 = scmp.ne.s32.totalorder %s138, %s141
      %p150 = scmp.eq.s32.totalorder %s23, 1
      %p151 = por %p149, %p150
      %p152 = scmp.ne.s32.totalorder %s141, %s142
      %p153 = scmp.eq.s32.totalorder %s23, 0
      %p154 = por %p152, %p153
      %p155 = scmp.ne.s32.totalorder %s141, %s142
      %p156 = scmp.eq.s32.totalorder %s24, 1
      %p157 = por %p155, %p156
      %p159 = scmp.ne.s32.totalorder %s142, %s158
      %p160 = scmp.eq.s32.totalorder %s24, 0
      %p161 = por %p159, %p160
      %p162 = scmp.le.s32.totalorder 1, %s18
      %p163 = scmp.lt.s32.totalorder %s18, 3
      %p164 = pnand %p162, %p163
      %p165 = pneg %p164
      // Predicated region
      $region9: #{tpu_custom_call.1} parent=5 // pred_check
        _
      $region10: #{tpu_custom_call.1} parent=5 // pred_check_branch
        %167 = sbr.rel (%p164) target = $region12
      $region11: #{tpu_custom_call.1} parent=5 // pred_region
        %s168 = ssub.s32 %s18, 1
        // Predicated region
        $region13: #{tpu_custom_call.1} parent=11 // pred_check
          %p169 = pneg %p65
        $region14: #{tpu_custom_call.1} parent=11 // pred_check_branch
          %171 = sbr.rel (%p169) target = $region16
        $region15: #{tpu_custom_call.1} parent=11 // pred_region
          %s173 = ssub.s32 8192, 8192
          %174 = vsyncadd [#allocation6], %s173
          %s175 = sshll.u32 [#allocation5], 4
          %s176 = int_to_ptr.vmem [resolvable:$true] %s175
          %181 = dma.hbm_to_vmem [thread:$0]  %s1, 8192, %s176, [#allocation6], 256, 256, 16
        $region16: #{tpu_custom_call.1} parent=11 // pred_fallthru
          _
        // Predicated region
        $region17: #{tpu_custom_call.1} parent=11 // pred_check
          %p182 = pneg %p86
        $region18: #{tpu_custom_call.1} parent=11 // pred_check_branch
          %184 = sbr.rel (%p182) target = $region20
        $region19: #{tpu_custom_call.1} parent=11 // pred_region
          _
        $region20: #{tpu_custom_call.1} parent=11 // pred_fallthru
          _
        // Predicated region
        $region21: #{tpu_custom_call.1} parent=11 // pred_check
          %p185 = pneg %p107
        $region22: #{tpu_custom_call.1} parent=11 // pred_check_branch
          %187 = sbr.rel (%p185) target = $region24
        $region23: #{tpu_custom_call.1} parent=11 // pred_region
          %s189 = ssub.s32 4096, 4096
          %190 = vsyncadd [#allocation6], %s189
          %s191 = sshll.u32 [#allocation7], 4
          %s192 = int_to_ptr.vmem [resolvable:$true] %s191
          %197 = dma.hbm_to_vmem [thread:$0]  %s3, 4096, %s192, [#allocation6], 64, 64, 4
        $region24: #{tpu_custom_call.1} parent=11 // pred_fallthru
          _
        // Predicated region
        $region25: #{tpu_custom_call.1} parent=11 // pred_check
          %p198 = pneg %p128
        $region26: #{tpu_custom_call.1} parent=11 // pred_check_branch
          %200 = sbr.rel (%p198) target = $region28
        $region27: #{tpu_custom_call.1} parent=11 // pred_region
          _
        $region28: #{tpu_custom_call.1} parent=11 // pred_fallthru
          _
      $region12: #{tpu_custom_call.1} parent=5 // pred_fallthru
        _
      %p201 = scmp.lt.s32.totalorder %s18, 2
      // Predicated region
      $region29: #{tpu_custom_call.1} parent=5 // pred_check
        %p202 = pneg %p201
      $region30: #{tpu_custom_call.1} parent=5 // pred_check_branch
        %204 = sbr.rel (%p202) target = $region32
      $region31: #{tpu_custom_call.1} parent=5 // pred_region
        // Predicated region
        $region33: #{tpu_custom_call.1} parent=31 // pred_check
          %p205 = pneg %p38
        $region34: #{tpu_custom_call.1} parent=31 // pred_check_branch
          %207 = sbr.rel (%p205) target = $region36
        $region35: #{tpu_custom_call.1} parent=31 // pred_region
          %s208 = sand.u32 %s28, 1
          %s209 = scalar_lea.sflag [#allocation3], %s208
          %s210 = sand.u32 %s28, 1
          %s211 = smul.addr %s210, 16
          %s212 = scalar_lea.vmem [#allocation2], %s211
          %s213 = smul.u32 2, %s18
          %s215 = ssub.s32 256, 256
          %216 = vsyncadd %s209, %s215
          %s217 = smul.addr %s213, 2
          %s218 = smul.addr %s217, 64
          %s219 = scalar_lea.hbm %s0, %s218
          %s220 = sshll.u32 %s212, 4
          %s221 = int_to_ptr.vmem [resolvable:$true] %s220
          %226 = dma.hbm_to_vmem [thread:$0]  %s219, 256, %s221, %s209, 128, 128, 8
        $region36: #{tpu_custom_call.1} parent=31 // pred_fallthru
          _
      $region32: #{tpu_custom_call.1} parent=5 // pred_fallthru
        _
      %p227 = scmp.le.s32.totalorder 1, %s18
      %p228 = scmp.lt.s32.totalorder %s18, 3
      %p229 = pnand %p227, %p228
      %p230 = pneg %p229
      // Predicated region
      $region37: #{tpu_custom_call.1} parent=5 // pred_check
        _
      $region38: #{tpu_custom_call.1} parent=5 // pred_check_branch
        %232 = sbr.rel (%p229) target = $region40
      $region39: #{tpu_custom_call.1} parent=5 // pred_region
        %s233 = ssub.s32 %s18, 1
        %s234 = sand.u32 %s31, 1
        %s235 = scalar_lea.sflag [#allocation3], %s234
        %s236 = sand.u32 %s31, 1
        %s237 = smul.addr %s236, 16
        %s238 = scalar_lea.vmem [#allocation2], %s237
        // Predicated region
        $region41: #{tpu_custom_call.1} parent=39 // pred_check
          %p239 = pneg %p44
        $region42: #{tpu_custom_call.1} parent=39 // pred_check_branch
          %241 = sbr.rel (%p239) target = $region44
        $region43: #{tpu_custom_call.1} parent=39 // pred_region
          %242 = dma.done %s235, 256
        $region44: #{tpu_custom_call.1} parent=39 // pred_fallthru
          _
        // Predicated region
        $region45: #{tpu_custom_call.1} parent=39 // pred_check
          %p243 = pneg %p65
        $region46: #{tpu_custom_call.1} parent=39 // pred_check_branch
          %245 = sbr.rel (%p243) target = $region48
        $region47: #{tpu_custom_call.1} parent=39 // pred_region
          %246 = dma.done [#allocation6], 8192
        $region48: #{tpu_custom_call.1} parent=39 // pred_fallthru
          _
        // Predicated region
        $region49: #{tpu_custom_call.1} parent=39 // pred_check
          %p247 = pneg %p107
        $region50: #{tpu_custom_call.1} parent=39 // pred_check_branch
          %249 = sbr.rel (%p247) target = $region52
        $region51: #{tpu_custom_call.1} parent=39 // pred_region
          %250 = dma.done [#allocation6], 4096
        $region52: #{tpu_custom_call.1} parent=39 // pred_fallthru
          _
        %s251 = sand.u32 %s31, 1
        %s252 = scalar_lea.sflag [#allocation3], %s251
        %s253 = sand.u32 %s31, 1
        %s254 = smul.addr %s253, 16
        %s255 = scalar_lea.vmem [#allocation2], %s254
        %p256 = pneg %p44
        %p257 = pneg %p41
        %p258 = pneg %p65
        %p259 = pneg %p62
        %p260 = pneg %p86
        %p261 = pneg %p83
        %p262 = pneg %p107
        %p263 = pneg %p104
        %p264 = pneg %p128
        %p265 = pneg %p125
        %p266 = pneg %p154
        %p267 = pneg %p151
        %s268 = sand.u32 %s141, 1
        %s269 = scalar_lea.sflag [#allocation4], %s268
        %s270 = sand.u32 %s141, 1
        %s271 = scalar_lea.vmem [#allocation8], %s270
        %s272 = smul.u32 2, %s23
        %v274 = vld [vmem:[%s238] sm:$0xff]
        %v275 = vld [vmem:[%s238 + $0x8] sm:$0xff]
        %v276 = vld [vmem:[#allocation5] sm:$0xff]
        %v277 = vld [vmem:[#allocation5 + $0x8] sm:$0xff]
        %v278 = vld [vmem:[#allocation5 + $0x10] sm:$0xff]
        %v279 = vld [vmem:[#allocation5 + $0x18] sm:$0xff]
        %v280 = vld [vmem:[#allocation5 + $0x20] sm:$0xff]
        %v281 = vld [vmem:[#allocation5 + $0x28] sm:$0xff]
        %v282 = vld [vmem:[#allocation5 + $0x30] sm:$0xff]
        %v283 = vld [vmem:[#allocation5 + $0x38] sm:$0xff]
        %v284 = vld [vmem:[#allocation5 + $0x40] sm:$0xff]
        %v285 = vld [vmem:[#allocation5 + $0x48] sm:$0xff]
        %v286 = vld [vmem:[#allocation5 + $0x50] sm:$0xff]
        %v287 = vld [vmem:[#allocation5 + $0x58] sm:$0xff]
        %v288 = vld [vmem:[#allocation5 + $0x60] sm:$0xff]
        %v289 = vld [vmem:[#allocation5 + $0x68] sm:$0xff]
        %v290 = vld [vmem:[#allocation5 + $0x70] sm:$0xff]
        %v291 = vld [vmem:[#allocation5 + $0x78] sm:$0xff]
        %v292 = vld [vmem:[#allocation5 + $0x80] sm:$0xff]
        %v293 = vld [vmem:[#allocation5 + $0x88] sm:$0xff]
        %v294 = vld [vmem:[#allocation5 + $0x90] sm:$0xff]
        %v295 = vld [vmem:[#allocation5 + $0x98] sm:$0xff]
        %v296 = vld [vmem:[#allocation5 + $0xa0] sm:$0xff]
        %v297 = vld [vmem:[#allocation5 + $0xa8] sm:$0xff]
        %v298 = vld [vmem:[#allocation5 + $0xb0] sm:$0xff]
        %v299 = vld [vmem:[#allocation5 + $0xb8] sm:$0xff]
        %v300 = vld [vmem:[#allocation5 + $0xc0] sm:$0xff]
        %v301 = vld [vmem:[#allocation5 + $0xc8] sm:$0xff]
        %v302 = vld [vmem:[#allocation5 + $0xd0] sm:$0xff]
        %v303 = vld [vmem:[#allocation5 + $0xd8] sm:$0xff]
        %v304 = vld [vmem:[#allocation5 + $0xe0] sm:$0xff]
        %v305 = vld [vmem:[#allocation5 + $0xe8] sm:$0xff]
        %v306 = vld [vmem:[#allocation5 + $0xf0] sm:$0xff]
        %v307 = vld [vmem:[#allocation5 + $0xf8] sm:$0xff]
        %v308 = vld [vmem:[#allocation5 + $0x100] sm:$0xff]
        %v309 = vld [vmem:[#allocation5 + $0x108] sm:$0xff]
        %v310 = vld [vmem:[#allocation5 + $0x110] sm:$0xff]
        %v311 = vld [vmem:[#allocation5 + $0x118] sm:$0xff]
        %v312 = vld [vmem:[#allocation5 + $0x120] sm:$0xff]
        %v313 = vld [vmem:[#allocation5 + $0x128] sm:$0xff]
        %v314 = vld [vmem:[#allocation5 + $0x130] sm:$0xff]
        %v315 = vld [vmem:[#allocation5 + $0x138] sm:$0xff]
        %v316 = vld [vmem:[#allocation5 + $0x140] sm:$0xff]
        %v317 = vld [vmem:[#allocation5 + $0x148] sm:$0xff]
        %v318 = vld [vmem:[#allocation5 + $0x150] sm:$0xff]
        %v319 = vld [vmem:[#allocation5 + $0x158] sm:$0xff]
        %v320 = vld [vmem:[#allocation5 + $0x160] sm:$0xff]
        %v321 = vld [vmem:[#allocation5 + $0x168] sm:$0xff]
        %v322 = vld [vmem:[#allocation5 + $0x170] sm:$0xff]
        %v323 = vld [vmem:[#allocation5 + $0x178] sm:$0xff]
        %v324 = vld [vmem:[#allocation5 + $0x180] sm:$0xff]
        %v325 = vld [vmem:[#allocation5 + $0x188] sm:$0xff]
        %v326 = vld [vmem:[#allocation5 + $0x190] sm:$0xff]
        %v327 = vld [vmem:[#allocation5 + $0x198] sm:$0xff]
        %v328 = vld [vmem:[#allocation5 + $0x1a0] sm:$0xff]
        %v329 = vld [vmem:[#allocation5 + $0x1a8] sm:$0xff]
        %v330 = vld [vmem:[#allocation5 + $0x1b0] sm:$0xff]
        %v331 = vld [vmem:[#allocation5 + $0x1b8] sm:$0xff]
        %v332 = vld [vmem:[#allocation5 + $0x1c0] sm:$0xff]
        %v333 = vld [vmem:[#allocation5 + $0x1c8] sm:$0xff]
        %v334 = vld [vmem:[#allocation5 + $0x1d0] sm:$0xff]
        %v335 = vld [vmem:[#allocation5 + $0x1d8] sm:$0xff]
        %v336 = vld [vmem:[#allocation5 + $0x1e0] sm:$0xff]
        %v337 = vld [vmem:[#allocation5 + $0x1e8] sm:$0xff]
        %v338 = vld [vmem:[#allocation5 + $0x1f0] sm:$0xff]
        %v339 = vld [vmem:[#allocation5 + $0x1f8] sm:$0xff]
        %v340 = vld [vmem:[%s2] sm:$0xf]
        %v342 = vlaneseq
        %v343 = vshrl.u32 %v342, 7
        %v344 = vsub.s32 0, %v343
        %v345 = vrot.slane %v340, %v344
        %v346 = vlaneseq
        %v347 = vshrl.u32 %v346, 7
        %v348 = vsub.s32 1, %v347
        %v349 = vrot.slane %v340, %v348
        %v350 = vlaneseq
        %v351 = vshrl.u32 %v350, 7
        %v352 = vsub.s32 2, %v351
        %v353 = vrot.slane %v340, %v352
        %v354 = vlaneseq
        %v355 = vshrl.u32 %v354, 7
        %v356 = vsub.s32 3, %v355
        %v357 = vrot.slane %v340, %v356
        %v364 = vunpack.c.l.b16 %v274
        %v365 = vunpack.c.h.b16 %v274
        %v366 = vunpack.c.l.b16 %v275
        %v367 = vunpack.c.h.b16 %v275
        %v368 = vpack.c.b16 %v366, %v364
        %v369 = vpack.c.b16 %v367, %v365
        %v436 = vunpack.c.l.b16 %v276
        %v437 = vunpack.c.h.b16 %v276
        %v438 = vunpack.c.l.b16 %v277
        %v439 = vunpack.c.h.b16 %v277
        %v440 = vunpack.c.l.b16 %v278
        %v441 = vunpack.c.h.b16 %v278
        %v442 = vunpack.c.l.b16 %v279
        %v443 = vunpack.c.h.b16 %v279
        %v444 = vunpack.c.l.b16 %v280
        %v445 = vunpack.c.h.b16 %v280
        %v446 = vunpack.c.l.b16 %v281
        %v447 = vunpack.c.h.b16 %v281
        %v448 = vunpack.c.l.b16 %v282
        %v449 = vunpack.c.h.b16 %v282
        %v450 = vunpack.c.l.b16 %v283
        %v451 = vunpack.c.h.b16 %v283
        %v452 = vunpack.c.l.b16 %v284
        %v453 = vunpack.c.h.b16 %v284
        %v454 = vunpack.c.l.b16 %v285
        %v455 = vunpack.c.h.b16 %v285
        %v456 = vunpack.c.l.b16 %v286
        %v457 = vunpack.c.h.b16 %v286
        %v458 = vunpack.c.l.b16 %v287
        %v459 = vunpack.c.h.b16 %v287
        %v460 = vunpack.c.l.b16 %v288
        %v461 = vunpack.c.h.b16 %v288
        %v462 = vunpack.c.l.b16 %v289
        %v463 = vunpack.c.h.b16 %v289
        %v464 = vunpack.c.l.b16 %v290
        %v465 = vunpack.c.h.b16 %v290
        %v466 = vunpack.c.l.b16 %v291
        %v467 = vunpack.c.h.b16 %v291
        %v468 = vunpack.c.l.b16 %v292
        %v469 = vunpack.c.h.b16 %v292
        %v470 = vunpack.c.l.b16 %v293
        %v471 = vunpack.c.h.b16 %v293
        %v472 = vunpack.c.l.b16 %v294
        %v473 = vunpack.c.h.b16 %v294
        %v474 = vunpack.c.l.b16 %v295
        %v475 = vunpack.c.h.b16 %v295
        %v476 = vunpack.c.l.b16 %v296
        %v477 = vunpack.c.h.b16 %v296
        %v478 = vunpack.c.l.b16 %v297
        %v479 = vunpack.c.h.b16 %v297
        %v480 = vunpack.c.l.b16 %v298
        %v481 = vunpack.c.h.b16 %v298
        %v482 = vunpack.c.l.b16 %v299
        %v483 = vunpack.c.h.b16 %v299
        %v484 = vunpack.c.l.b16 %v300
        %v485 = vunpack.c.h.b16 %v300
        %v486 = vunpack.c.l.b16 %v301
        %v487 = vunpack.c.h.b16 %v301
        %v488 = vunpack.c.l.b16 %v302
        %v489 = vunpack.c.h.b16 %v302
        %v490 = vunpack.c.l.b16 %v303
        %v491 = vunpack.c.h.b16 %v303
        %v492 = vunpack.c.l.b16 %v304
        %v493 = vunpack.c.h.b16 %v304
        %v494 = vunpack.c.l.b16 %v305
        %v495 = vunpack.c.h.b16 %v305
        %v496 = vunpack.c.l.b16 %v306
        %v497 = vunpack.c.h.b16 %v306
        %v498 = vunpack.c.l.b16 %v307
        %v499 = vunpack.c.h.b16 %v307
        %v500 = vunpack.c.l.b16 %v308
        %v501 = vunpack.c.h.b16 %v308
        %v502 = vunpack.c.l.b16 %v309
        %v503 = vunpack.c.h.b16 %v309
        %v504 = vunpack.c.l.b16 %v310
        %v505 = vunpack.c.h.b16 %v310
        %v506 = vunpack.c.l.b16 %v311
        %v507 = vunpack.c.h.b16 %v311
        %v508 = vunpack.c.l.b16 %v312
        %v509 = vunpack.c.h.b16 %v312
        %v510 = vunpack.c.l.b16 %v313
        %v511 = vunpack.c.h.b16 %v313
        %v512 = vunpack.c.l.b16 %v314
        %v513 = vunpack.c.h.b16 %v314
        %v514 = vunpack.c.l.b16 %v315
        %v515 = vunpack.c.h.b16 %v315
        %v516 = vunpack.c.l.b16 %v316
        %v517 = vunpack.c.h.b16 %v316
        %v518 = vunpack.c.l.b16 %v317
        %v519 = vunpack.c.h.b16 %v317
        %v520 = vunpack.c.l.b16 %v318
        %v521 = vunpack.c.h.b16 %v318
        %v522 = vunpack.c.l.b16 %v319
        %v523 = vunpack.c.h.b16 %v319
        %v524 = vunpack.c.l.b16 %v320
        %v525 = vunpack.c.h.b16 %v320
        %v526 = vunpack.c.l.b16 %v321
        %v527 = vunpack.c.h.b16 %v321
        %v528 = vunpack.c.l.b16 %v322
        %v529 = vunpack.c.h.b16 %v322
        %v530 = vunpack.c.l.b16 %v323
        %v531 = vunpack.c.h.b16 %v323
        %v532 = vunpack.c.l.b16 %v324
        %v533 = vunpack.c.h.b16 %v324
        %v534 = vunpack.c.l.b16 %v325
        %v535 = vunpack.c.h.b16 %v325
        %v536 = vunpack.c.l.b16 %v326
        %v537 = vunpack.c.h.b16 %v326
        %v538 = vunpack.c.l.b16 %v327
        %v539 = vunpack.c.h.b16 %v327
        %v540 = vunpack.c.l.b16 %v328
        %v541 = vunpack.c.h.b16 %v328
        %v542 = vunpack.c.l.b16 %v329
        %v543 = vunpack.c.h.b16 %v329
        %v544 = vunpack.c.l.b16 %v330
        %v545 = vunpack.c.h.b16 %v330
        %v546 = vunpack.c.l.b16 %v331
        %v547 = vunpack.c.h.b16 %v331
        %v548 = vunpack.c.l.b16 %v332
        %v549 = vunpack.c.h.b16 %v332
        %v550 = vunpack.c.l.b16 %v333
        %v551 = vunpack.c.h.b16 %v333
        %v552 = vunpack.c.l.b16 %v334
        %v553 = vunpack.c.h.b16 %v334
        %v554 = vunpack.c.l.b16 %v335
        %v555 = vunpack.c.h.b16 %v335
        %v556 = vunpack.c.l.b16 %v336
        %v557 = vunpack.c.h.b16 %v336
        %v558 = vunpack.c.l.b16 %v337
        %v559 = vunpack.c.h.b16 %v337
        %v560 = vunpack.c.l.b16 %v338
        %v561 = vunpack.c.h.b16 %v338
        %v562 = vunpack.c.l.b16 %v339
        %v563 = vunpack.c.h.b16 %v339
        %v564 = vpack.c.b16 %v440, %v436
        %v565 = vpack.c.b16 %v441, %v437
        %v566 = vpack.c.b16 %v442, %v438
        %v567 = vpack.c.b16 %v443, %v439
        %v568 = vpack.c.b16 %v448, %v444
        %v569 = vpack.c.b16 %v449, %v445
        %v570 = vpack.c.b16 %v450, %v446
        %v571 = vpack.c.b16 %v451, %v447
        %v572 = vpack.c.b16 %v456, %v452
        %v573 = vpack.c.b16 %v457, %v453
        %v574 = vpack.c.b16 %v458, %v454
        %v575 = vpack.c.b16 %v459, %v455
        %v576 = vpack.c.b16 %v464, %v460
        %v577 = vpack.c.b16 %v465, %v461
        %v578 = vpack.c.b16 %v466, %v462
        %v579 = vpack.c.b16 %v467, %v463
        %v580 = vpack.c.b16 %v472, %v468
        %v581 = vpack.c.b16 %v473, %v469
        %v582 = vpack.c.b16 %v474, %v470
        %v583 = vpack.c.b16 %v475, %v471
        %v584 = vpack.c.b16 %v480, %v476
        %v585 = vpack.c.b16 %v481, %v477
        %v586 = vpack.c.b16 %v482, %v478
        %v587 = vpack.c.b16 %v483, %v479
        %v588 = vpack.c.b16 %v488, %v484
        %v589 = vpack.c.b16 %v489, %v485
        %v590 = vpack.c.b16 %v490, %v486
        %v591 = vpack.c.b16 %v491, %v487
        %v592 = vpack.c.b16 %v496, %v492
        %v593 = vpack.c.b16 %v497, %v493
        %v594 = vpack.c.b16 %v498, %v494
        %v595 = vpack.c.b16 %v499, %v495
        %v596 = vpack.c.b16 %v504, %v500
        %v597 = vpack.c.b16 %v505, %v501
        %v598 = vpack.c.b16 %v506, %v502
        %v599 = vpack.c.b16 %v507, %v503
        %v600 = vpack.c.b16 %v512, %v508
        %v601 = vpack.c.b16 %v513, %v509
        %v602 = vpack.c.b16 %v514, %v510
        %v603 = vpack.c.b16 %v515, %v511
        %v604 = vpack.c.b16 %v520, %v516
        %v605 = vpack.c.b16 %v521, %v517
        %v606 = vpack.c.b16 %v522, %v518
        %v607 = vpack.c.b16 %v523, %v519
        %v608 = vpack.c.b16 %v528, %v524
        %v609 = vpack.c.b16 %v529, %v525
        %v610 = vpack.c.b16 %v530, %v526
        %v611 = vpack.c.b16 %v531, %v527
        %v612 = vpack.c.b16 %v536, %v532
        %v613 = vpack.c.b16 %v537, %v533
        %v614 = vpack.c.b16 %v538, %v534
        %v615 = vpack.c.b16 %v539, %v535
        %v616 = vpack.c.b16 %v544, %v540
        %v617 = vpack.c.b16 %v545, %v541
        %v618 = vpack.c.b16 %v546, %v542
        %v619 = vpack.c.b16 %v547, %v543
        %v620 = vpack.c.b16 %v552, %v548
        %v621 = vpack.c.b16 %v553, %v549
        %v622 = vpack.c.b16 %v554, %v550
        %v623 = vpack.c.b16 %v555, %v551
        %v624 = vpack.c.b16 %v560, %v556
        %v625 = vpack.c.b16 %v561, %v557
        %v626 = vpack.c.b16 %v562, %v558
        %v627 = vpack.c.b16 %v563, %v559
        %692 = vmatprep.subr.bf16.mxu0 %v565
        %693 = vmatpush1.bf16.msra.mxu0 %v564
        %694 = vmatprep.subr.bf16.mxu0 %v569
        %695 = vmatpush1.bf16.msra.mxu0 %v568
        %696 = vmatprep.subr.bf16.mxu0 %v573
        %697 = vmatpush1.bf16.msra.mxu0 %v572
        %698 = vmatprep.subr.bf16.mxu0 %v577
        %699 = vmatpush1.bf16.msra.mxu0 %v576
        %700 = vmatprep.subr.bf16.mxu0 %v581
        %701 = vmatpush1.bf16.msra.mxu0 %v580
        %702 = vmatprep.subr.bf16.mxu0 %v585
        %703 = vmatpush1.bf16.msra.mxu0 %v584
        %704 = vmatprep.subr.bf16.mxu0 %v589
        %705 = vmatpush1.bf16.msra.mxu0 %v588
        %706 = vmatprep.subr.bf16.mxu0 %v593
        %707 = vmatpush1.bf16.msra.mxu0 %v592
        %708 = vmatprep.subr.bf16.mxu0 %v597
        %709 = vmatpush1.bf16.msra.mxu0 %v596
        %710 = vmatprep.subr.bf16.mxu0 %v601
        %711 = vmatpush1.bf16.msra.mxu0 %v600
        %712 = vmatprep.subr.bf16.mxu0 %v605
        %713 = vmatpush1.bf16.msra.mxu0 %v604
        %714 = vmatprep.subr.bf16.mxu0 %v609
        %715 = vmatpush1.bf16.msra.mxu0 %v608
        %716 = vmatprep.subr.bf16.mxu0 %v613
        %717 = vmatpush1.bf16.msra.mxu0 %v612
        %718 = vmatprep.subr.bf16.mxu0 %v617
        %719 = vmatpush1.bf16.msra.mxu0 %v616
        %720 = vmatprep.subr.bf16.mxu0 %v621
        %721 = vmatpush1.bf16.msra.mxu0 %v620
        %722 = vmatprep.subr.bf16.mxu0 %v625
        %723 = vmatpush1.bf16.msra.mxu0 %v624
        %724 = vmatprep.mubr.bf16.mxu0 %v369
        %725 = vmatmul.mubr.bf16.gmra.mrb[0].mxu0 %v368
        %v726 = vpop.f32.mrb[0].mxu0
        %v727 = vadd.f32 %v345, %v726
        %v728 = vpop.f32.mrb[0].mxu0
        %v729 = vadd.f32 %v349, %v728
        %v730 = vpop.f32.mrb[0].mxu0
        %v731 = vadd.f32 %v345, %v730
        %v732 = vpop.f32.mrb[0].mxu0
        %v733 = vadd.f32 %v349, %v732
        %734 = vdwg.mxu0
        %735 = vmatprep.subr.bf16.mxu0 %v567
        %736 = vmatpush1.bf16.msra.mxu0 %v566
        %737 = vmatprep.subr.bf16.mxu0 %v571
        %738 = vmatpush1.bf16.msra.mxu0 %v570
        %739 = vmatprep.subr.bf16.mxu0 %v575
        %740 = vmatpush1.bf16.msra.mxu0 %v574
        %741 = vmatprep.subr.bf16.mxu0 %v579
        %742 = vmatpush1.bf16.msra.mxu0 %v578
        %743 = vmatprep.subr.bf16.mxu0 %v583
        %744 = vmatpush1.bf16.msra.mxu0 %v582
        %745 = vmatprep.subr.bf16.mxu0 %v587
        %746 = vmatpush1.bf16.msra.mxu0 %v586
        %747 = vmatprep.subr.bf16.mxu0 %v591
        %748 = vmatpush1.bf16.msra.mxu0 %v590
        %749 = vmatprep.subr.bf16.mxu0 %v595
        %750 = vmatpush1.bf16.msra.mxu0 %v594
        %751 = vmatprep.subr.bf16.mxu0 %v599
        %752 = vmatpush1.bf16.msra.mxu0 %v598
        %753 = vmatprep.subr.bf16.mxu0 %v603
        %754 = vmatpush1.bf16.msra.mxu0 %v602
        %755 = vmatprep.subr.bf16.mxu0 %v607
        %756 = vmatpush1.bf16.msra.mxu0 %v606
        %757 = vmatprep.subr.bf16.mxu0 %v611
        %758 = vmatpush1.bf16.msra.mxu0 %v610
        %759 = vmatprep.subr.bf16.mxu0 %v615
        %760 = vmatpush1.bf16.msra.mxu0 %v614
        %761 = vmatprep.subr.bf16.mxu0 %v619
        %762 = vmatpush1.bf16.msra.mxu0 %v618
        %763 = vmatprep.subr.bf16.mxu0 %v623
        %764 = vmatpush1.bf16.msra.mxu0 %v622
        %765 = vmatprep.subr.bf16.mxu0 %v627
        %766 = vmatpush1.bf16.msra.mxu0 %v626
        %767 = vmatprep.mubr.bf16.mxu0 %v369
        %768 = vmatmul.mubr.bf16.gmra.mrb[0].mxu0 %v368
        %v769 = vpop.f32.mrb[0].mxu0
        %v770 = vadd.f32 %v353, %v769
        %v771 = vpop.f32.mrb[0].mxu0
        %v772 = vadd.f32 %v357, %v771
        %v773 = vpop.f32.mrb[0].mxu0
        %v774 = vadd.f32 %v353, %v773
        %v775 = vpop.f32.mrb[0].mxu0
        %v776 = vadd.f32 %v357, %v775
        %777 = vdwg.mxu0
        %v778 = vmax.f32 %v727, 0.0
        %v779 = vmax.f32 %v729, 0.0
        %v780 = vmax.f32 %v770, 0.0
        %v781 = vmax.f32 %v772, 0.0
        %v782 = vmax.f32 %v731, 0.0
        %v783 = vmax.f32 %v733, 0.0
        %v784 = vmax.f32 %v774, 0.0
        %v785 = vmax.f32 %v776, 0.0
        %v786 = vpack.c.bf16 %v782, %v778
        %v787 = vpack.c.bf16 %v783, %v779
        %v788 = vpack.c.bf16 %v784, %v780
        %v789 = vpack.c.bf16 %v785, %v781
        %v790 = vld [vmem:[#allocation7] sm:$0xf]
        %v791 = vld [vmem:[#allocation7 + $0x4] sm:$0xf]
        %v792 = vld [vmem:[#allocation7 + $0x8] sm:$0xf]
        %v793 = vld [vmem:[#allocation7 + $0xc] sm:$0xf]
        %v794 = vld [vmem:[#allocation7 + $0x10] sm:$0xf]
        %v795 = vld [vmem:[#allocation7 + $0x14] sm:$0xf]
        %v796 = vld [vmem:[#allocation7 + $0x18] sm:$0xf]
        %v797 = vld [vmem:[#allocation7 + $0x1c] sm:$0xf]
        %v798 = vld [vmem:[#allocation7 + $0x20] sm:$0xf]
        %v799 = vld [vmem:[#allocation7 + $0x24] sm:$0xf]
        %v800 = vld [vmem:[#allocation7 + $0x28] sm:$0xf]
        %v801 = vld [vmem:[#allocation7 + $0x2c] sm:$0xf]
        %v802 = vld [vmem:[#allocation7 + $0x30] sm:$0xf]
        %v803 = vld [vmem:[#allocation7 + $0x34] sm:$0xf]
        %v804 = vld [vmem:[#allocation7 + $0x38] sm:$0xf]
        %v805 = vld [vmem:[#allocation7 + $0x3c] sm:$0xf]
        %v806 = vld [vmem:[#allocation7 + $0x40] sm:$0xf]
        %v807 = vld [vmem:[#allocation7 + $0x44] sm:$0xf]
        %v808 = vld [vmem:[#allocation7 + $0x48] sm:$0xf]
        %v809 = vld [vmem:[#allocation7 + $0x4c] sm:$0xf]
        %v810 = vld [vmem:[#allocation7 + $0x50] sm:$0xf]
        %v811 = vld [vmem:[#allocation7 + $0x54] sm:$0xf]
        %v812 = vld [vmem:[#allocation7 + $0x58] sm:$0xf]
        %v813 = vld [vmem:[#allocation7 + $0x5c] sm:$0xf]
        %v814 = vld [vmem:[#allocation7 + $0x60] sm:$0xf]
        %v815 = vld [vmem:[#allocation7 + $0x64] sm:$0xf]
        %v816 = vld [vmem:[#allocation7 + $0x68] sm:$0xf]
        %v817 = vld [vmem:[#allocation7 + $0x6c] sm:$0xf]
        %v818 = vld [vmem:[#allocation7 + $0x70] sm:$0xf]
        %v819 = vld [vmem:[#allocation7 + $0x74] sm:$0xf]
        %v820 = vld [vmem:[#allocation7 + $0x78] sm:$0xf]
        %v821 = vld [vmem:[#allocation7 + $0x7c] sm:$0xf]
        %v822 = vld [vmem:[#allocation7 + $0x80] sm:$0xf]
        %v823 = vld [vmem:[#allocation7 + $0x84] sm:$0xf]
        %v824 = vld [vmem:[#allocation7 + $0x88] sm:$0xf]
        %v825 = vld [vmem:[#allocation7 + $0x8c] sm:$0xf]
        %v826 = vld [vmem:[#allocation7 + $0x90] sm:$0xf]
        %v827 = vld [vmem:[#allocation7 + $0x94] sm:$0xf]
        %v828 = vld [vmem:[#allocation7 + $0x98] sm:$0xf]
        %v829 = vld [vmem:[#allocation7 + $0x9c] sm:$0xf]
        %v830 = vld [vmem:[#allocation7 + $0xa0] sm:$0xf]
        %v831 = vld [vmem:[#allocation7 + $0xa4] sm:$0xf]
        %v832 = vld [vmem:[#allocation7 + $0xa8] sm:$0xf]
        %v833 = vld [vmem:[#allocation7 + $0xac] sm:$0xf]
        %v834 = vld [vmem:[#allocation7 + $0xb0] sm:$0xf]
        %v835 = vld [vmem:[#allocation7 + $0xb4] sm:$0xf]
        %v836 = vld [vmem:[#allocation7 + $0xb8] sm:$0xf]
        %v837 = vld [vmem:[#allocation7 + $0xbc] sm:$0xf]
        %v838 = vld [vmem:[#allocation7 + $0xc0] sm:$0xf]
        %v839 = vld [vmem:[#allocation7 + $0xc4] sm:$0xf]
        %v840 = vld [vmem:[#allocation7 + $0xc8] sm:$0xf]
        %v841 = vld [vmem:[#allocation7 + $0xcc] sm:$0xf]
        %v842 = vld [vmem:[#allocation7 + $0xd0] sm:$0xf]
        %v843 = vld [vmem:[#allocation7 + $0xd4] sm:$0xf]
        %v844 = vld [vmem:[#allocation7 + $0xd8] sm:$0xf]
        %v845 = vld [vmem:[#allocation7 + $0xdc] sm:$0xf]
        %v846 = vld [vmem:[#allocation7 + $0xe0] sm:$0xf]
        %v847 = vld [vmem:[#allocation7 + $0xe4] sm:$0xf]
        %v848 = vld [vmem:[#allocation7 + $0xe8] sm:$0xf]
        %v849 = vld [vmem:[#allocation7 + $0xec] sm:$0xf]
        %v850 = vld [vmem:[#allocation7 + $0xf0] sm:$0xf]
        %v851 = vld [vmem:[#allocation7 + $0xf4] sm:$0xf]
        %v852 = vld [vmem:[#allocation7 + $0xf8] sm:$0xf]
        %v853 = vld [vmem:[#allocation7 + $0xfc] sm:$0xf]
        %v918 = vunpack.c.l.b16 %v790
        %v919 = vunpack.c.l.b16 %v791
        %v920 = vunpack.c.l.b16 %v792
        %v921 = vunpack.c.l.b16 %v793
        %v922 = vunpack.c.l.b16 %v794
        %v923 = vunpack.c.l.b16 %v795
        %v924 = vunpack.c.l.b16 %v796
        %v925 = vunpack.c.l.b16 %v797
        %v926 = vunpack.c.l.b16 %v798
        %v927 = vunpack.c.l.b16 %v799
        %v928 = vunpack.c.l.b16 %v800
        %v929 = vunpack.c.l.b16 %v801
        %v930 = vunpack.c.l.b16 %v802
        %v931 = vunpack.c.l.b16 %v803
        %v932 = vunpack.c.l.b16 %v804
        %v933 = vunpack.c.l.b16 %v805
        %v934 = vunpack.c.l.b16 %v806
        %v935 = vunpack.c.l.b16 %v807
        %v936 = vunpack.c.l.b16 %v808
        %v937 = vunpack.c.l.b16 %v809
        %v938 = vunpack.c.l.b16 %v810
        %v939 = vunpack.c.l.b16 %v811
        %v940 = vunpack.c.l.b16 %v812
        %v941 = vunpack.c.l.b16 %v813
        %v942 = vunpack.c.l.b16 %v814
        %v943 = vunpack.c.l.b16 %v815
        %v944 = vunpack.c.l.b16 %v816
        %v945 = vunpack.c.l.b16 %v817
        %v946 = vunpack.c.l.b16 %v818
        %v947 = vunpack.c.l.b16 %v819
        %v948 = vunpack.c.l.b16 %v820
        %v949 = vunpack.c.l.b16 %v821
        %v950 = vunpack.c.l.b16 %v822
        %v951 = vunpack.c.l.b16 %v823
        %v952 = vunpack.c.l.b16 %v824
        %v953 = vunpack.c.l.b16 %v825
        %v954 = vunpack.c.l.b16 %v826
        %v955 = vunpack.c.l.b16 %v827
        %v956 = vunpack.c.l.b16 %v828
        %v957 = vunpack.c.l.b16 %v829
        %v958 = vunpack.c.l.b16 %v830
        %v959 = vunpack.c.l.b16 %v831
        %v960 = vunpack.c.l.b16 %v832
        %v961 = vunpack.c.l.b16 %v833
        %v962 = vunpack.c.l.b16 %v834
        %v963 = vunpack.c.l.b16 %v835
        %v964 = vunpack.c.l.b16 %v836
        %v965 = vunpack.c.l.b16 %v837
        %v966 = vunpack.c.l.b16 %v838
        %v967 = vunpack.c.l.b16 %v839
        %v968 = vunpack.c.l.b16 %v840
        %v969 = vunpack.c.l.b16 %v841
        %v970 = vunpack.c.l.b16 %v842
        %v971 = vunpack.c.l.b16 %v843
        %v972 = vunpack.c.l.b16 %v844
        %v973 = vunpack.c.l.b16 %v845
        %v974 = vunpack.c.l.b16 %v846
        %v975 = vunpack.c.l.b16 %v847
        %v976 = vunpack.c.l.b16 %v848
        %v977 = vunpack.c.l.b16 %v849
        %v978 = vunpack.c.l.b16 %v850
        %v979 = vunpack.c.l.b16 %v851
        %v980 = vunpack.c.l.b16 %v852
        %v981 = vunpack.c.l.b16 %v853
        %v982 = vpack.c.b16 %v919, %v918
        %v983 = vpack.c.b16 %v921, %v920
        %v984 = vpack.c.b16 %v923, %v922
        %v985 = vpack.c.b16 %v925, %v924
        %v986 = vpack.c.b16 %v927, %v926
        %v987 = vpack.c.b16 %v929, %v928
        %v988 = vpack.c.b16 %v931, %v930
        %v989 = vpack.c.b16 %v933, %v932
        %v990 = vpack.c.b16 %v935, %v934
        %v991 = vpack.c.b16 %v937, %v936
        %v992 = vpack.c.b16 %v939, %v938
        %v993 = vpack.c.b16 %v941, %v940
        %v994 = vpack.c.b16 %v943, %v942
        %v995 = vpack.c.b16 %v945, %v944
        %v996 = vpack.c.b16 %v947, %v946
        %v997 = vpack.c.b16 %v949, %v948
        %v998 = vpack.c.b16 %v951, %v950
        %v999 = vpack.c.b16 %v953, %v952
        %v1000 = vpack.c.b16 %v955, %v954
        %v1001 = vpack.c.b16 %v957, %v956
        %v1002 = vpack.c.b16 %v959, %v958
        %v1003 = vpack.c.b16 %v961, %v960
        %v1004 = vpack.c.b16 %v963, %v962
        %v1005 = vpack.c.b16 %v965, %v964
        %v1006 = vpack.c.b16 %v967, %v966
        %v1007 = vpack.c.b16 %v969, %v968
        %v1008 = vpack.c.b16 %v971, %v970
        %v1009 = vpack.c.b16 %v973, %v972
        %v1010 = vpack.c.b16 %v975, %v974
        %v1011 = vpack.c.b16 %v977, %v976
        %v1012 = vpack.c.b16 %v979, %v978
        %v1013 = vpack.c.b16 %v981, %v980
        %1046 = vmatprep.subr.bf16.mxu0 0
        %1047 = vmatpush1.bf16.msra.mxu0 %v982
        %1048 = vmatprep.subr.bf16.mxu0 0
        %1049 = vmatpush1.bf16.msra.mxu0 %v983
        %1050 = vmatprep.subr.bf16.mxu0 0
        %1051 = vmatpush1.bf16.msra.mxu0 %v984
        %1052 = vmatprep.subr.bf16.mxu0 0
        %1053 = vmatpush1.bf16.msra.mxu0 %v985
        %1054 = vmatprep.subr.bf16.mxu0 0
        %1055 = vmatpush1.bf16.msra.mxu0 %v986
        %1056 = vmatprep.subr.bf16.mxu0 0
        %1057 = vmatpush1.bf16.msra.mxu0 %v987
        %1058 = vmatprep.subr.bf16.mxu0 0
        %1059 = vmatpush1.bf16.msra.mxu0 %v988
        %1060 = vmatprep.subr.bf16.mxu0 0
        %1061 = vmatpush1.bf16.msra.mxu0 %v989
        %1062 = vmatprep.subr.bf16.mxu0 0
        %1063 = vmatpush1.bf16.msra.mxu0 %v990
        %1064 = vmatprep.subr.bf16.mxu0 0
        %1065 = vmatpush1.bf16.msra.mxu0 %v991
        %1066 = vmatprep.subr.bf16.mxu0 0
        %1067 = vmatpush1.bf16.msra.mxu0 %v992
        %1068 = vmatprep.subr.bf16.mxu0 0
        %1069 = vmatpush1.bf16.msra.mxu0 %v993
        %1070 = vmatprep.subr.bf16.mxu0 0
        %1071 = vmatpush1.bf16.msra.mxu0 %v994
        %1072 = vmatprep.subr.bf16.mxu0 0
        %1073 = vmatpush1.bf16.msra.mxu0 %v995
        %1074 = vmatprep.subr.bf16.mxu0 0
        %1075 = vmatpush1.bf16.msra.mxu0 %v996
        %1076 = vmatprep.subr.bf16.mxu0 0
        %1077 = vmatpush1.bf16.msra.mxu0 %v997
        %1078 = vmatprep.mubr.bf16.mxu0 %v787
        %1079 = vmatmul.mubr.bf16.gmra.mrb[0].mxu0 %v786
        %v1080 = vpop.f32.mrb[0].mxu0
        %v1081 = vadd.f32 0.0, %v1080
        %v1082 = vpop.f32.mrb[0].mxu0
        %v1083 = vpop.f32.mrb[0].mxu0
        %v1084 = vadd.f32 0.0, %v1083
        %v1085 = vpop.f32.mrb[0].mxu0
        %1086 = vdwg.mxu0
        %1087 = vmatprep.subr.bf16.mxu0 0
        %1088 = vmatpush1.bf16.msra.mxu0 %v998
        %1089 = vmatprep.subr.bf16.mxu0 0
        %1090 = vmatpush1.bf16.msra.mxu0 %v999
        %1091 = vmatprep.subr.bf16.mxu0 0
        %1092 = vmatpush1.bf16.msra.mxu0 %v1000
        %1093 = vmatprep.subr.bf16.mxu0 0
        %1094 = vmatpush1.bf16.msra.mxu0 %v1001
        %1095 = vmatprep.subr.bf16.mxu0 0
        %1096 = vmatpush1.bf16.msra.mxu0 %v1002
        %1097 = vmatprep.subr.bf16.mxu0 0
        %1098 = vmatpush1.bf16.msra.mxu0 %v1003
        %1099 = vmatprep.subr.bf16.mxu0 0
        %1100 = vmatpush1.bf16.msra.mxu0 %v1004
        %1101 = vmatprep.subr.bf16.mxu0 0
        %1102 = vmatpush1.bf16.msra.mxu0 %v1005
        %1103 = vmatprep.subr.bf16.mxu0 0
        %1104 = vmatpush1.bf16.msra.mxu0 %v1006
        %1105 = vmatprep.subr.bf16.mxu0 0
        %1106 = vmatpush1.bf16.msra.mxu0 %v1007
        %1107 = vmatprep.subr.bf16.mxu0 0
        %1108 = vmatpush1.bf16.msra.mxu0 %v1008
        %1109 = vmatprep.subr.bf16.mxu0 0
        %1110 = vmatpush1.bf16.msra.mxu0 %v1009
        %1111 = vmatprep.subr.bf16.mxu0 0
        %1112 = vmatpush1.bf16.msra.mxu0 %v1010
        %1113 = vmatprep.subr.bf16.mxu0 0
        %1114 = vmatpush1.bf16.msra.mxu0 %v1011
        %1115 = vmatprep.subr.bf16.mxu0 0
        %1116 = vmatpush1.bf16.msra.mxu0 %v1012
        %1117 = vmatprep.subr.bf16.mxu0 0
        %1118 = vmatpush1.bf16.msra.mxu0 %v1013
        %1119 = vmatprep.mubr.bf16.mxu0 %v789
        %1120 = vmatmul.mubr.bf16.gmra.mrb[0].mxu0 %v788
        %v1121 = vpop.f32.mrb[0].mxu0
        %v1122 = vadd.f32 %v1081, %v1121
        %v1123 = vpop.f32.mrb[0].mxu0
        %v1124 = vpop.f32.mrb[0].mxu0
        %v1125 = vadd.f32 %v1084, %v1124
        %v1126 = vpop.f32.mrb[0].mxu0
        %1127 = vdwg.mxu0
        %v1128 = vadd.f32 %v1122, %v1125
        %v1129 = vrot.slane %v1128, 4
        %v1130 = vadd.f32 %v1128, %v1129
        %v1131 = vrot.slane %v1130, 2
        %v1132 = vadd.f32 %v1130, %v1131
        %v1133 = vrot.slane %v1132, 1
        %v1134 = vadd.f32 %v1132, %v1133
        %v1135 = vld [vmem:[%s4] sm:$0x1]
        %v1136 = vadd.f32 %v1134, %v1135
        %1137 = vst [vmem:[%s271] sm:$0x1] %v1136
        %s1138 = sand.u32 %s141, 1
        %s1139 = scalar_lea.sflag [#allocation4], %s1138
        %s1140 = sand.u32 %s141, 1
        %s1141 = scalar_lea.vmem [#allocation8], %s1140
        // Predicated region
        $region53: #{tpu_custom_call.1} parent=39 // pred_check
          %p1142 = pneg %p151
        $region54: #{tpu_custom_call.1} parent=39 // pred_check_branch
          %1144 = sbr.rel (%p1142) target = $region56
        $region55: #{tpu_custom_call.1} parent=39 // pred_region
          %s1146 = ssub.s32 16, 16
          %1147 = vsyncadd %s1139, %s1146
          %s1148 = smul.addr %s23, 16
          %s1149 = scalar_lea.hbm %s5, %s1148
          %s1151 = sshll.u32 %s1141, 4
          %s1152 = int_to_ptr.vmem [resolvable:$true] %s1151
          %1154 = dma.vmem_to_hbm [thread:$0]  %s1152, 16, %s1149, %s1139
        $region56: #{tpu_custom_call.1} parent=39 // pred_fallthru
          _
      $region40: #{tpu_custom_call.1} parent=5 // pred_fallthru
        _
      %p1155 = scmp.le.s32.totalorder 2, %s18
      // Predicated region
      $region57: #{tpu_custom_call.1} parent=5 // pred_check
        %p1156 = pneg %p1155
      $region58: #{tpu_custom_call.1} parent=5 // pred_check_branch
        %1158 = sbr.rel (%p1156) target = $region60
      $region59: #{tpu_custom_call.1} parent=5 // pred_region
        %s1159 = ssub.s32 %s18, 2
        // Predicated region
        $region61: #{tpu_custom_call.1} parent=59 // pred_check
          %p1160 = pneg %p157
        $region62: #{tpu_custom_call.1} parent=59 // pred_check_branch
          %1162 = sbr.rel (%p1160) target = $region64
        $region63: #{tpu_custom_call.1} parent=59 // pred_region
          %s1163 = sand.u32 %s142, 1
          %s1164 = scalar_lea.sflag [#allocation4], %s1163
          %s1165 = sand.u32 %s142, 1
          %s1166 = scalar_lea.vmem [#allocation8], %s1165
          %1167 = dma.done %s1164, 16
        $region64: #{tpu_custom_call.1} parent=59 // pred_fallthru
          _
      $region60: #{tpu_custom_call.1} parent=5 // pred_fallthru
        _
    $region6: #{tpu_custom_call.1} parent=1 // loop_footer
      %s22 = sadd.s32 1, %s18
    $region7: #{tpu_custom_call.1} parent=1 // loop_footer_branch
      %17 = sbr.rel target = $region3
    $region8: #{tpu_custom_call.1} parent=1 // loop_exit
      _
    %1168 = vsyncpa [#allocation3], 1
    %s1169 = scalar_lea.sflag [#allocation3], 1
    %1170 = vsyncpa %s1169, 1
    %1171 = vsyncpa [#allocation6], 1
    %1172 = vsyncpa [#allocation4], 1
    %s1173 = scalar_lea.sflag [#allocation4], 1
    %1174 = vsyncpa %s1173, 1

</llo_original>
